<compile_context>
chip_gen: v7x
topology: tpu7x:2x2x1
jax: 0.10.0
libtpu: 0.0.40
codegen_flags: <defaults>
</compile_context>

<pallas_src>
import jax
import jax.numpy as jnp
from jax.experimental import pallas as pl
from jax.experimental.pallas import tpu as pltpu


def _round_up(x, m):
    return (x + m - 1) // m * m


def dqn_kernel(x_ref, w1_ref, b1_ref, w2_ref, b2_ref, w3_ref, b3_ref, o_ref):
    # fc1: Linear + ReLU (Dropout = identity at eval).
    # bf16 x bf16 MXU matmul, f32 accumulation; elementwise in f32.
    x = x_ref[...]
    h1 = jnp.dot(x.astype(jnp.bfloat16), w1_ref[...],
                 preferred_element_type=jnp.float32)
    h1 = jnp.maximum(h1 + b1_ref[...], 0.0)
    # outer torch.relu(fc1(x)) is a no-op on an already-ReLU'd value.

    # fc2: Linear + ReLU
    h2 = jnp.dot(h1.astype(jnp.bfloat16), w2_ref[...],
                 preferred_element_type=jnp.float32)
    h2 = jnp.maximum(h2 + b2_ref[...], 0.0)

    # fc3: Linear
    out = jnp.dot(h2.astype(jnp.bfloat16), w3_ref[...],
                  preferred_element_type=jnp.float32)
    o_ref[...] = (out + b3_ref[...]).astype(o_ref.dtype)


def dqn_forward(x, params, *, tm=256):
    """x: (batch, input_dim) f32.  params: bf16 weights (in,out), f32 biases (1,out)."""
    w1, b1, w2, b2, w3, b3 = params
    batch, in_dim = x.shape
    hid = w1.shape[1]
    out_dim = w3.shape[1]

    # Lane-dense final layer: pad output width up to a multiple of 128 and
    # slice back below (avoids masked partial stores on the lane axis).
    out_pad = _round_up(out_dim, 128)
    if out_pad != out_dim:
        w3 = jnp.pad(w3, ((0, 0), (0, out_pad - out_dim)))
        b3 = jnp.pad(b3, ((0, 0), (0, out_pad - out_dim)))

    # Batch tiling: shrink the tile for tiny batches, pad batch to a multiple.
    tm_eff = min(tm, _round_up(batch, 8))
    batch_pad = _round_up(batch, tm_eff)
    if batch_pad != batch:
        x = jnp.pad(x, ((0, batch_pad - batch), (0, 0)))
    grid = (batch_pad // tm_eff,)

    # Weights/biases: constant index_map -> VMEM-resident across the grid.
    resident = lambda a: pl.BlockSpec(a.shape, lambda i: (0,) * a.ndim)
    in_specs = [
        pl.BlockSpec((tm_eff, in_dim), lambda i: (i, 0)),   # x tiled on batch
        resident(w1), resident(b1),
        resident(w2), resident(b2),
        resident(w3), resident(b3),
    ]
    out_specs = pl.BlockSpec((tm_eff, out_pad), lambda i: (i, 0))

    flops = 2 * batch_pad * (in_dim * hid + hid * hid + hid * out_pad)
    bytes_accessed = (
        x.size * x.dtype.itemsize
        + sum(a.size * a.dtype.itemsize for a in (w1, b1, w2, b2, w3, b3))
        + batch_pad * out_pad * 4
    )
    cost = pl.CostEstimate(flops=flops, transcendentals=0,
                           bytes_accessed=bytes_accessed)

    out = pl.pallas_call(
        dqn_kernel,
        out_shape=jax.ShapeDtypeStruct((batch_pad, out_pad), jnp.float32),
        grid=grid,
        in_specs=in_specs,
        out_specs=out_specs,
        compiler_params=pltpu.CompilerParams(
            dimension_semantics=("parallel",),   # use both TCs on v7x
            vmem_limit_bytes=64 << 20,
        ),
        cost_estimate=cost,
    )(x, w1, b1, w2, b2, w3, b3)

    return out[:batch, :out_dim]


def init_params(key, input_dim, output_dim, hidden=512):
    # Deterministic synthetic init (mimics nn.Linear's U(-1/sqrt(fan_in), ..)).
    # Weights stored (in, out) so the kernel computes y = x @ W + b directly,
    # and cast to bf16 to halve weight DMA traffic; biases stay f32.
    ks = jax.random.split(key, 6)

    def linear(kw, kb, fan_in, fan_out):
        bound = 1.0 / jnp.sqrt(fan_in)
        w = jax.random.uniform(kw, (fan_in, fan_out), jnp.float32, -bound, bound)
        b = jax.random.uniform(kb, (1, fan_out), jnp.float32, -bound, bound)
        return w.astype(jnp.bfloat16), b

    w1, b1 = linear(ks[0], ks[1], input_dim, hidden)
    w2, b2 = linear(ks[2], ks[3], hidden, hidden)
    w3, b3 = linear(ks[4], ks[5], hidden, output_dim)
    return (w1, b1, w2, b2, w3, b3)


def ref_forward(x, params):
    # Pure-JAX reference mirroring the kernel's bf16-in / f32-accumulate math.
    w1, b1, w2, b2, w3, b3 = params
    bf = jnp.bfloat16
    h1 = jnp.maximum(
        jnp.dot(x.astype(bf), w1, preferred_element_type=jnp.float32) + b1, 0.0)
    h2 = jnp.maximum(
        jnp.dot(h1.astype(bf), w2, preferred_element_type=jnp.float32) + b2, 0.0)
    return jnp.dot(h2.astype(bf), w3, preferred_element_type=jnp.float32) + b3


if __name__ == "__main__":
    key = jax.random.PRNGKey(0)
    k_x, k_p, k_x2 = jax.random.split(key, 3)

    batch, input_dim, output_dim = 8, 32, 8
    x = jax.random.normal(k_x, (batch, input_dim), dtype=jnp.float32)
    params = init_params(k_p, input_dim, output_dim)

    # Small-batch path (single grid step).
    out = dqn_forward(x, params)
    jax.block_until_ready(out)
    assert out.shape == (batch, output_dim)
    assert jnp.allclose(out, ref_forward(x, params), atol=1e-2, rtol=1e-2)

    # Replay-batch path (exercises batch tiling / padding, grid > 1).
    batch2 = 272
    x2 = jax.random.normal(k_x2, (batch2, input_dim), dtype=jnp.float32)
    out2 = dqn_forward(x2, params)
    jax.block_until_ready(out2)
    assert out2.shape == (batch2, output_dim)
    assert jnp.allclose(out2, ref_forward(x2, params), atol=1e-2, rtol=1e-2)

    print("KERNEL_OK")
</pallas_src>

<mosaic_0001>
module attributes {stable_mosaic.version = 11 : i64} {
  func.func @dqn_kernel(%arg0: i32, %arg1: memref<8x32xf32, #tpu.memory_space<vmem>>, %arg2: memref<32x512xbf16, #tpu.memory_space<vmem>>, %arg3: memref<1x512xf32, #tpu.memory_space<vmem>>, %arg4: memref<512x512xbf16, #tpu.memory_space<vmem>>, %arg5: memref<1x512xf32, #tpu.memory_space<vmem>>, %arg6: memref<512x128xbf16, #tpu.memory_space<vmem>>, %arg7: memref<1x128xf32, #tpu.memory_space<vmem>>, %arg8: memref<8x128xf32, #tpu.memory_space<vmem>>) attributes {dimension_semantics = [#tpu.dimension_semantics<parallel>], iteration_bounds = array<i64: 1>, scalar_prefetch = 0 : i64, scratch_operands = 0 : i64, tpu.core_type = #tpu.core_type<tc>, window_params = [{transform_indices = @transform_0, window_bounds = array<i64: 8, 32>}, {pipeline_mode = #tpu.pipeline_mode<synchronous>, transform_indices = @transform_1, window_bounds = array<i64: 32, 512>}, {pipeline_mode = #tpu.pipeline_mode<synchronous>, transform_indices = @transform_2, window_bounds = array<i64: 1, 512>}, {pipeline_mode = #tpu.pipeline_mode<synchronous>, transform_indices = @transform_3, window_bounds = array<i64: 512, 512>}, {pipeline_mode = #tpu.pipeline_mode<synchronous>, transform_indices = @transform_4, window_bounds = array<i64: 1, 512>}, {pipeline_mode = #tpu.pipeline_mode<synchronous>, transform_indices = @transform_5, window_bounds = array<i64: 512, 128>}, {pipeline_mode = #tpu.pipeline_mode<synchronous>, transform_indices = @transform_6, window_bounds = array<i64: 1, 128>}, {transform_indices = @transform_7, window_bounds = array<i64: 8, 128>}]} {
    %c0 = arith.constant 0 : index
    %c0_0 = arith.constant 0 : index
    %0 = vector.load %arg1[%c0, %c0_0] : memref<8x32xf32, #tpu.memory_space<vmem>>, vector<8x32xf32>
    %1 = arith.truncf %0 : vector<8x32xf32> to vector<8x32xbf16>
    %c0_1 = arith.constant 0 : index
    %c0_2 = arith.constant 0 : index
    %2 = vector.load %arg2[%c0_1, %c0_2] : memref<32x512xbf16, #tpu.memory_space<vmem>>, vector<32x512xbf16>
    %cst = arith.constant dense<0.000000e+00> : vector<8x512xf32>
    %3 = tpu.matmul %1, %2, %cst {dimension_numbers = #tpu.dot_dimension_numbers<[1], [0], [0], [1], [0, 0, 1, 1], [], []>} : vector<8x32xbf16>, vector<32x512xbf16>, vector<8x512xf32> -> vector<8x512xf32>
    %c0_3 = arith.constant 0 : index
    %c0_4 = arith.constant 0 : index
    %4 = vector.load %arg3[%c0_3, %c0_4] : memref<1x512xf32, #tpu.memory_space<vmem>>, vector<1x512xf32>
    %5 = vector.broadcast %4 : vector<1x512xf32> to vector<8x512xf32>
    %6 = arith.addf %3, %5 : vector<8x512xf32>
    %cst_5 = arith.constant 0.000000e+00 : f32
    %7 = vector.broadcast %cst_5 : f32 to vector<8x512xf32>
    %8 = arith.maximumf %6, %7 : vector<8x512xf32>
    %9 = arith.truncf %8 : vector<8x512xf32> to vector<8x512xbf16>
    %c0_6 = arith.constant 0 : index
    %c0_7 = arith.constant 0 : index
    %10 = vector.load %arg4[%c0_6, %c0_7] : memref<512x512xbf16, #tpu.memory_space<vmem>>, vector<512x512xbf16>
    %cst_8 = arith.constant dense<0.000000e+00> : vector<8x512xf32>
    %11 = tpu.matmul %9, %10, %cst_8 {dimension_numbers = #tpu.dot_dimension_numbers<[1], [0], [0], [1], [0, 0, 1, 1], [], []>} : vector<8x512xbf16>, vector<512x512xbf16>, vector<8x512xf32> -> vector<8x512xf32>
    %c0_9 = arith.constant 0 : index
    %c0_10 = arith.constant 0 : index
    %12 = vector.load %arg5[%c0_9, %c0_10] : memref<1x512xf32, #tpu.memory_space<vmem>>, vector<1x512xf32>
    %13 = vector.broadcast %12 : vector<1x512xf32> to vector<8x512xf32>
    %14 = arith.addf %11, %13 : vector<8x512xf32>
    %cst_11 = arith.constant 0.000000e+00 : f32
    %15 = vector.broadcast %cst_11 : f32 to vector<8x512xf32>
    %16 = arith.maximumf %14, %15 : vector<8x512xf32>
    %17 = arith.truncf %16 : vector<8x512xf32> to vector<8x512xbf16>
    %c0_12 = arith.constant 0 : index
    %c0_13 = arith.constant 0 : index
    %18 = vector.load %arg6[%c0_12, %c0_13] : memref<512x128xbf16, #tpu.memory_space<vmem>>, vector<512x128xbf16>
    %cst_14 = arith.constant dense<0.000000e+00> : vector<8x128xf32>
    %19 = tpu.matmul %17, %18, %cst_14 {dimension_numbers = #tpu.dot_dimension_numbers<[1], [0], [0], [1], [0, 0, 1, 1], [], []>} : vector<8x512xbf16>, vector<512x128xbf16>, vector<8x128xf32> -> vector<8x128xf32>
    %c0_15 = arith.constant 0 : index
    %c0_16 = arith.constant 0 : index
    %20 = vector.load %arg7[%c0_15, %c0_16] : memref<1x128xf32, #tpu.memory_space<vmem>>, vector<1x128xf32>
    %21 = vector.broadcast %20 : vector<1x128xf32> to vector<8x128xf32>
    %22 = arith.addf %19, %21 : vector<8x128xf32>
    %c0_17 = arith.constant 0 : index
    %c0_18 = arith.constant 0 : index
    %23 = vector.load %arg8[%c0_17, %c0_18] : memref<8x128xf32, #tpu.memory_space<vmem>>, vector<8x128xf32>
    tpu.vector_store %arg8[%c0_17, %c0_18], %22 {strides = array<i32>} : memref<8x128xf32, #tpu.memory_space<vmem>>, vector<8x128xf32>,
    return
  }
  func.func @transform_0(%arg0: i32) -> (i32, i32) {
    %c0_i32 = arith.constant 0 : i32
    %c0_i32_0 = arith.constant 0 : i32
    return %arg0, %c0_i32 : i32, i32
  }
  func.func @transform_1(%arg0: i32) -> (i32, i32) {
    %c0_i32 = arith.constant 0 : i32
    %c0_i32_0 = arith.constant 0 : i32
    %c0_i32_1 = arith.constant 0 : i32
    return %c0_i32, %c0_i32_0 : i32, i32
  }
  func.func @transform_2(%arg0: i32) -> (i32, i32) {
    %c0_i32 = arith.constant 0 : i32
    %c0_i32_0 = arith.constant 0 : i32
    %c0_i32_1 = arith.constant 0 : i32
    return %c0_i32, %c0_i32_0 : i32, i32
  }
  func.func @transform_3(%arg0: i32) -> (i32, i32) {
    %c0_i32 = arith.constant 0 : i32
    %c0_i32_0 = arith.constant 0 : i32
    %c0_i32_1 = arith.constant 0 : i32
    return %c0_i32, %c0_i32_0 : i32, i32
  }
  func.func @transform_4(%arg0: i32) -> (i32, i32) {
    %c0_i32 = arith.constant 0 : i32
    %c0_i32_0 = arith.constant 0 : i32
    %c0_i32_1 = arith.constant 0 : i32
    return %c0_i32, %c0_i32_0 : i32, i32
  }
  func.func @transform_5(%arg0: i32) -> (i32, i32) {
    %c0_i32 = arith.constant 0 : i32
    %c0_i32_0 = arith.constant 0 : i32
    %c0_i32_1 = arith.constant 0 : i32
    return %c0_i32, %c0_i32_0 : i32, i32
  }
  func.func @transform_6(%arg0: i32) -> (i32, i32) {
    %c0_i32 = arith.constant 0 : i32
    %c0_i32_0 = arith.constant 0 : i32
    %c0_i32_1 = arith.constant 0 : i32
    return %c0_i32, %c0_i32_0 : i32, i32
  }
  func.func @transform_7(%arg0: i32) -> (i32, i32) {
    %c0_i32 = arith.constant 0 : i32
    %c0_i32_0 = arith.constant 0 : i32
    return %arg0, %c0_i32 : i32, i32
  }
}

</mosaic_0001>

<llo_original>
// kernel: tpu_custom_call.1
$region0: #{tpu_custom_call.1}
  #allocation0 [shape = 'u32[]', space=smem, size = 0x4, offset = 0x4, fixed_abs, tag = 'smem constant byte address 0x4 - core index']
  #allocation1 [shape = 'u32[144,128]{1,0:T(1,128)}', space=vmem, size = 0x12000, scoped, tag = 'internal scratch']
  %s0 = inlined_call_operand.hbm [shape: f32[8,32], index: 0, kind: input, shape index: {}]
  %s1 = inlined_call_operand.hbm [shape: bf16[32,512], index: 1, kind: input, shape index: {}]
  %s2 = inlined_call_operand.hbm [shape: f32[1,512], index: 2, kind: input, shape index: {}]
  %s3 = inlined_call_operand.hbm [shape: bf16[512,512], index: 3, kind: input, shape index: {}]
  %s4 = inlined_call_operand.hbm [shape: f32[1,512], index: 4, kind: input, shape index: {}]
  %s5 = inlined_call_operand.hbm [shape: bf16[512,128], index: 5, kind: input, shape index: {}]
  %s6 = inlined_call_operand.hbm [shape: f32[1,128], index: 6, kind: input, shape index: {}]
  %s7 = inlined_call_operand.hbm [shape: f32[8,128], index: 7, kind: output, shape index: {}]
  %s8 = sld [smem:[#allocation0]]
  $region66: #{tpu_custom_call.1} parent=0
    _
  %s10 = ssub.s32 1, %s8
  %s11 = scalar_select 0, %s10, %s8
  $region1: #{tpu_custom_call.1} parent=0
    #allocation2 [shape = 'u8[4096]{0}', space=vmem, size = 0x1000, scoped, tag = 'input window, operand 0, single buffered']
    #allocation3 [shape = 's32[1]{0}', space=sflag, size = 0x4, scoped, tag = 'scoped memory for tpu_custom_call.1']
    #allocation4 [shape = 's32[1]{0}', space=sflag, size = 0x4, scoped, tag = 'scoped memory for tpu_custom_call.1']
    #allocation5 [shape = 'u8[32768]{0}', space=vmem, size = 0x8000, scoped, tag = 'input window, operand 1, single buffered']
    #allocation6 [shape = 's32[1]{0}', space=sflag, size = 0x4, scoped, tag = 'scoped memory for tpu_custom_call.1']
    #allocation7 [shape = 'u8[2048]{0}', space=vmem, size = 0x800, scoped, tag = 'input window, operand 2, single buffered']
    #allocation8 [shape = 'u8[524288]{0}', space=vmem, size = 0x80000, scoped, tag = 'input window, operand 3, single buffered']
    #allocation9 [shape = 's32[1]{0}', space=sflag, size = 0x4, scoped, tag = 'scoped memory for tpu_custom_call.1']
    #allocation10 [shape = 'u8[2048]{0}', space=vmem, size = 0x800, scoped, tag = 'input window, operand 4, single buffered']
    #allocation11 [shape = 'u8[131072]{0}', space=vmem, size = 0x20000, scoped, tag = 'input window, operand 5, single buffered']
    #allocation12 [shape = 's32[1]{0}', space=sflag, size = 0x4, scoped, tag = 'scoped memory for tpu_custom_call.1']
    #allocation13 [shape = 'u8[512]{0}', space=vmem, size = 0x400, scoped, tag = 'input window, operand 6, single buffered']
    #allocation14 [shape = 'u8[4096]{0}', space=vmem, size = 0x1000, scoped, tag = 'output window, operand 0, single buffered']
    %12 = vsyncpa [#allocation3], 0
    %13 = vsyncpa [#allocation6], 0
    %14 = vsyncpa [#allocation9], 0
    %15 = vsyncpa [#allocation12], 0
    %16 = vsyncpa [#allocation4], 0
    // Predicated region
    $region2: #{tpu_custom_call.1} parent=1 // pred_check
      _
    $region3: #{tpu_custom_call.1} parent=1 // pred_check_branch
      %18 = sbr.rel (0) target = $region5
    $region4: #{tpu_custom_call.1} parent=1 // pred_region
      %s20 = ssub.s32 128, 128
      %21 = vsyncadd [#allocation3], %s20
      %s23 = sshll.u32 [#allocation2], 4
      %s24 = int_to_ptr.vmem [resolvable:$true] %s23
      %26 = dma.hbm_to_vmem [thread:$0]  %s0, 128, %s24, [#allocation3]
    $region5: #{tpu_custom_call.1} parent=1 // pred_fallthru
      _
    // Predicated region
    $region6: #{tpu_custom_call.1} parent=1 // pred_check
      _
    $region7: #{tpu_custom_call.1} parent=1 // pred_check_branch
      %28 = sbr.rel (0) target = $region9
    $region8: #{tpu_custom_call.1} parent=1 // pred_region
      %s30 = ssub.s32 1024, 1024
      %31 = vsyncadd [#allocation6], %s30
      %s32 = sshll.u32 [#allocation5], 4
      %s33 = int_to_ptr.vmem [resolvable:$true] %s32
      %38 = dma.hbm_to_vmem [thread:$0]  %s1, 1024, %s33, [#allocation6], 256, 256, 16
    $region9: #{tpu_custom_call.1} parent=1 // pred_fallthru
      _
    // Predicated region
    $region10: #{tpu_custom_call.1} parent=1 // pred_check
      _
    $region11: #{tpu_custom_call.1} parent=1 // pred_check_branch
      %40 = sbr.rel (0) target = $region13
    $region12: #{tpu_custom_call.1} parent=1 // pred_region
      %s42 = ssub.s32 64, 64
      %43 = vsyncadd [#allocation6], %s42
      %s45 = sshll.u32 [#allocation7], 4
      %s46 = int_to_ptr.vmem [resolvable:$true] %s45
      %48 = dma.hbm_to_vmem [thread:$0]  %s2, 64, %s46, [#allocation6]
    $region13: #{tpu_custom_call.1} parent=1 // pred_fallthru
      _
    // Predicated region
    $region14: #{tpu_custom_call.1} parent=1 // pred_check
      _
    $region15: #{tpu_custom_call.1} parent=1 // pred_check_branch
      %50 = sbr.rel (0) target = $region17
    $region16: #{tpu_custom_call.1} parent=1 // pred_region
      %s52 = ssub.s32 16384, 16384
      %53 = vsyncadd [#allocation9], %s52
      %s54 = sshll.u32 [#allocation8], 4
      %s55 = int_to_ptr.vmem [resolvable:$true] %s54
      %60 = dma.hbm_to_vmem [thread:$0]  %s3, 16384, %s55, [#allocation9], 256, 256, 16
    $region17: #{tpu_custom_call.1} parent=1 // pred_fallthru
      _
    // Predicated region
    $region18: #{tpu_custom_call.1} parent=1 // pred_check
      _
    $region19: #{tpu_custom_call.1} parent=1 // pred_check_branch
      %62 = sbr.rel (0) target = $region21
    $region20: #{tpu_custom_call.1} parent=1 // pred_region
      %s64 = ssub.s32 64, 64
      %65 = vsyncadd [#allocation9], %s64
      %s67 = sshll.u32 [#allocation10], 4
      %s68 = int_to_ptr.vmem [resolvable:$true] %s67
      %70 = dma.hbm_to_vmem [thread:$0]  %s4, 64, %s68, [#allocation9]
    $region21: #{tpu_custom_call.1} parent=1 // pred_fallthru
      _
    // Predicated region
    $region22: #{tpu_custom_call.1} parent=1 // pred_check
      _
    $region23: #{tpu_custom_call.1} parent=1 // pred_check_branch
      %72 = sbr.rel (0) target = $region25
    $region24: #{tpu_custom_call.1} parent=1 // pred_region
      %s74 = ssub.s32 4096, 4096
      %75 = vsyncadd [#allocation12], %s74
      %s76 = sshll.u32 [#allocation11], 4
      %s77 = int_to_ptr.vmem [resolvable:$true] %s76
      %82 = dma.hbm_to_vmem [thread:$0]  %s5, 4096, %s77, [#allocation12], 64, 64, 4
    $region25: #{tpu_custom_call.1} parent=1 // pred_fallthru
      _
    // Predicated region
    $region26: #{tpu_custom_call.1} parent=1 // pred_check
      _
    $region27: #{tpu_custom_call.1} parent=1 // pred_check_branch
      %84 = sbr.rel (0) target = $region29
    $region28: #{tpu_custom_call.1} parent=1 // pred_region
      %s86 = ssub.s32 16, 16
      %87 = vsyncadd [#allocation12], %s86
      %s89 = sshll.u32 [#allocation13], 4
      %s90 = int_to_ptr.vmem [resolvable:$true] %s89
      %92 = dma.hbm_to_vmem [thread:$0]  %s6, 16, %s90, [#allocation12]
    $region29: #{tpu_custom_call.1} parent=1 // pred_fallthru
      _
    // Predicated region
    $region30: #{tpu_custom_call.1} parent=1 // pred_check
      _
    $region31: #{tpu_custom_call.1} parent=1 // pred_check_branch
      %94 = sbr.rel (0) target = $region33
    $region32: #{tpu_custom_call.1} parent=1 // pred_region
      %95 = dma.done [#allocation3], 128
    $region33: #{tpu_custom_call.1} parent=1 // pred_fallthru
      _
    // Predicated region
    $region34: #{tpu_custom_call.1} parent=1 // pred_check
      _
    $region35: #{tpu_custom_call.1} parent=1 // pred_check_branch
      %97 = sbr.rel (0) target = $region37
    $region36: #{tpu_custom_call.1} parent=1 // pred_region
      %98 = dma.done [#allocation6], 1024
    $region37: #{tpu_custom_call.1} parent=1 // pred_fallthru
      _
    // Predicated region
    $region38: #{tpu_custom_call.1} parent=1 // pred_check
      _
    $region39: #{tpu_custom_call.1} parent=1 // pred_check_branch
      %100 = sbr.rel (0) target = $region41
    $region40: #{tpu_custom_call.1} parent=1 // pred_region
      %101 = dma.done [#allocation6], 64
    $region41: #{tpu_custom_call.1} parent=1 // pred_fallthru
      _
    // Predicated region
    $region42: #{tpu_custom_call.1} parent=1 // pred_check
      _
    $region43: #{tpu_custom_call.1} parent=1 // pred_check_branch
      %103 = sbr.rel (0) target = $region45
    $region44: #{tpu_custom_call.1} parent=1 // pred_region
      %104 = dma.done [#allocation9], 16384
    $region45: #{tpu_custom_call.1} parent=1 // pred_fallthru
      _
    // Predicated region
    $region46: #{tpu_custom_call.1} parent=1 // pred_check
      _
    $region47: #{tpu_custom_call.1} parent=1 // pred_check_branch
      %106 = sbr.rel (0) target = $region49
    $region48: #{tpu_custom_call.1} parent=1 // pred_region
      %107 = dma.done [#allocation9], 64
    $region49: #{tpu_custom_call.1} parent=1 // pred_fallthru
      _
    // Predicated region
    $region50: #{tpu_custom_call.1} parent=1 // pred_check
      _
    $region51: #{tpu_custom_call.1} parent=1 // pred_check_branch
      %109 = sbr.rel (0) target = $region53
    $region52: #{tpu_custom_call.1} parent=1 // pred_region
      %110 = dma.done [#allocation12], 4096
    $region53: #{tpu_custom_call.1} parent=1 // pred_fallthru
      _
    // Predicated region
    $region54: #{tpu_custom_call.1} parent=1 // pred_check
      _
    $region55: #{tpu_custom_call.1} parent=1 // pred_check_branch
      %112 = sbr.rel (0) target = $region57
    $region56: #{tpu_custom_call.1} parent=1 // pred_region
      %113 = dma.done [#allocation12], 16
    $region57: #{tpu_custom_call.1} parent=1 // pred_fallthru
      _
    %v115 = vld [vmem:[#allocation2] sm:$0xff]
    %v116 = vpack.c.bf16 %v115, %v115
    %v117 = vld [vmem:[#allocation5] sm:$0xff]
    %v118 = vld [vmem:[#allocation5 + $0x8] sm:$0xff]
    %v119 = vld [vmem:[#allocation5 + $0x10] sm:$0xff]
    %v120 = vld [vmem:[#allocation5 + $0x18] sm:$0xff]
    %v121 = vld [vmem:[#allocation5 + $0x20] sm:$0xff]
    %v122 = vld [vmem:[#allocation5 + $0x28] sm:$0xff]
    %v123 = vld [vmem:[#allocation5 + $0x30] sm:$0xff]
    %v124 = vld [vmem:[#allocation5 + $0x38] sm:$0xff]
    %v125 = vld [vmem:[#allocation7] sm:$0xf]
    %v127 = vlaneseq
    %v128 = vshrl.u32 %v127, 7
    %v129 = vsub.s32 0, %v128
    %v130 = vrot.slane %v125, %v129
    %v131 = vlaneseq
    %v132 = vshrl.u32 %v131, 7
    %v133 = vsub.s32 1, %v132
    %v134 = vrot.slane %v125, %v133
    %v135 = vlaneseq
    %v136 = vshrl.u32 %v135, 7
    %v137 = vsub.s32 2, %v136
    %v138 = vrot.slane %v125, %v137
    %v139 = vlaneseq
    %v140 = vshrl.u32 %v139, 7
    %v141 = vsub.s32 3, %v140
    %v142 = vrot.slane %v125, %v141
    %v155 = vunpack.c.l.b16 %v117
    %v156 = vunpack.c.h.b16 %v117
    %v157 = vunpack.c.l.b16 %v118
    %v158 = vunpack.c.h.b16 %v118
    %v159 = vunpack.c.l.b16 %v119
    %v160 = vunpack.c.h.b16 %v119
    %v161 = vunpack.c.l.b16 %v120
    %v162 = vunpack.c.h.b16 %v120
    %v163 = vunpack.c.l.b16 %v121
    %v164 = vunpack.c.h.b16 %v121
    %v165 = vunpack.c.l.b16 %v122
    %v166 = vunpack.c.h.b16 %v122
    %v167 = vunpack.c.l.b16 %v123
    %v168 = vunpack.c.h.b16 %v123
    %v169 = vunpack.c.l.b16 %v124
    %v170 = vunpack.c.h.b16 %v124
    %v171 = vpack.c.b16 %v159, %v155
    %v172 = vpack.c.b16 %v160, %v156
    %v173 = vpack.c.b16 %v161, %v157
    %v174 = vpack.c.b16 %v162, %v158
    %v175 = vpack.c.b16 %v167, %v163
    %v176 = vpack.c.b16 %v168, %v164
    %v177 = vpack.c.b16 %v169, %v165
    %v178 = vpack.c.b16 %v170, %v166
    %vm187 = vcmask 261120
    %v189 = vsel %vm187, %v116, 0
    %191 = vmatprep.subr.bf16.mxu0 %v172
    %192 = vmatpush1.bf16.msra.mxu0 %v171
    %193 = vmatprep.subr.bf16.mxu0 %v176
    %194 = vmatpush1.bf16.msra.mxu0 %v175
    %195 = vmatprep.subr.bf16.mxu0 0
    %196 = vmatpush1.bf16.msra.mxu0 0
    %197 = vmatprep.subr.bf16.mxu0 0
    %198 = vmatpush1.bf16.msra.mxu0 0
    %199 = vmatprep.subr.bf16.mxu0 0
    %200 = vmatpush1.bf16.msra.mxu0 0
    %201 = vmatprep.subr.bf16.mxu0 0
    %202 = vmatpush1.bf16.msra.mxu0 0
    %203 = vmatprep.subr.bf16.mxu0 0
    %204 = vmatpush1.bf16.msra.mxu0 0
    %205 = vmatprep.subr.bf16.mxu0 0
    %206 = vmatpush1.bf16.msra.mxu0 0
    %207 = vmatprep.subr.bf16.mxu0 0
    %208 = vmatpush1.bf16.msra.mxu0 0
    %209 = vmatprep.subr.bf16.mxu0 0
    %210 = vmatpush1.bf16.msra.mxu0 0
    %211 = vmatprep.subr.bf16.mxu0 0
    %212 = vmatpush1.bf16.msra.mxu0 0
    %213 = vmatprep.subr.bf16.mxu0 0
    %214 = vmatpush1.bf16.msra.mxu0 0
    %215 = vmatprep.subr.bf16.mxu0 0
    %216 = vmatpush1.bf16.msra.mxu0 0
    %217 = vmatprep.subr.bf16.mxu0 0
    %218 = vmatpush1.bf16.msra.mxu0 0
    %219 = vmatprep.subr.bf16.mxu0 0
    %220 = vmatpush1.bf16.msra.mxu0 0
    %221 = vmatprep.subr.bf16.mxu0 0
    %222 = vmatpush1.bf16.msra.mxu0 0
    %223 = vmatprep.mubr.bf16.mxu0 0
    %224 = vmatmul.mubr.bf16.gmra.mrb[0].mxu0 %v189
    %v225 = vpop.f32.mrb[0].mxu0
    %v226 = vadd.f32 %v130, %v225
    %v227 = vpop.f32.mrb[0].mxu0
    %v228 = vadd.f32 %v134, %v227
    %v229 = vpop.f32.mrb[0].mxu0
    %v230 = vpop.f32.mrb[0].mxu0
    %231 = vdwg.mxu0
    %232 = vmatprep.subr.bf16.mxu0 %v174
    %233 = vmatpush1.bf16.msra.mxu0 %v173
    %234 = vmatprep.subr.bf16.mxu0 %v178
    %235 = vmatpush1.bf16.msra.mxu0 %v177
    %236 = vmatprep.subr.bf16.mxu0 0
    %237 = vmatpush1.bf16.msra.mxu0 0
    %238 = vmatprep.subr.bf16.mxu0 0
    %239 = vmatpush1.bf16.msra.mxu0 0
    %240 = vmatprep.subr.bf16.mxu0 0
    %241 = vmatpush1.bf16.msra.mxu0 0
    %242 = vmatprep.subr.bf16.mxu0 0
    %243 = vmatpush1.bf16.msra.mxu0 0
    %244 = vmatprep.subr.bf16.mxu0 0
    %245 = vmatpush1.bf16.msra.mxu0 0
    %246 = vmatprep.subr.bf16.mxu0 0
    %247 = vmatpush1.bf16.msra.mxu0 0
    %248 = vmatprep.subr.bf16.mxu0 0
    %249 = vmatpush1.bf16.msra.mxu0 0
    %250 = vmatprep.subr.bf16.mxu0 0
    %251 = vmatpush1.bf16.msra.mxu0 0
    %252 = vmatprep.subr.bf16.mxu0 0
    %253 = vmatpush1.bf16.msra.mxu0 0
    %254 = vmatprep.subr.bf16.mxu0 0
    %255 = vmatpush1.bf16.msra.mxu0 0
    %256 = vmatprep.subr.bf16.mxu0 0
    %257 = vmatpush1.bf16.msra.mxu0 0
    %258 = vmatprep.subr.bf16.mxu0 0
    %259 = vmatpush1.bf16.msra.mxu0 0
    %260 = vmatprep.subr.bf16.mxu0 0
    %261 = vmatpush1.bf16.msra.mxu0 0
    %262 = vmatprep.subr.bf16.mxu0 0
    %263 = vmatpush1.bf16.msra.mxu0 0
    %264 = vmatprep.mubr.bf16.mxu0 0
    %265 = vmatmul.mubr.bf16.gmra.mrb[0].mxu0 %v189
    %v266 = vpop.f32.mrb[0].mxu0
    %v267 = vadd.f32 %v138, %v266
    %v268 = vpop.f32.mrb[0].mxu0
    %v269 = vadd.f32 %v142, %v268
    %v270 = vpop.f32.mrb[0].mxu0
    %v271 = vpop.f32.mrb[0].mxu0
    %272 = vdwg.mxu0
    %v273 = vmax.f32 %v226, 0.0
    %v274 = vmax.f32 %v228, 0.0
    %v275 = vmax.f32 %v267, 0.0
    %v276 = vmax.f32 %v269, 0.0
    %v277 = vpack.c.bf16 %v273, %v273
    %v278 = vpack.c.bf16 %v274, %v274
    %v279 = vpack.c.bf16 %v275, %v275
    %v280 = vpack.c.bf16 %v276, %v276
    %v281 = vld [vmem:[#allocation8] sm:$0xff]
    %v282 = vld [vmem:[#allocation8 + $0x8] sm:$0xff]
    %v283 = vld [vmem:[#allocation8 + $0x10] sm:$0xff]
    %v284 = vld [vmem:[#allocation8 + $0x18] sm:$0xff]
    %v285 = vld [vmem:[#allocation8 + $0x20] sm:$0xff]
    %v286 = vld [vmem:[#allocation8 + $0x28] sm:$0xff]
    %v287 = vld [vmem:[#allocation8 + $0x30] sm:$0xff]
    %v288 = vld [vmem:[#allocation8 + $0x38] sm:$0xff]
    %v289 = vld [vmem:[#allocation8 + $0x40] sm:$0xff]
    %v290 = vld [vmem:[#allocation8 + $0x48] sm:$0xff]
    %v291 = vld [vmem:[#allocation8 + $0x50] sm:$0xff]
    %v292 = vld [vmem:[#allocation8 + $0x58] sm:$0xff]
    %v293 = vld [vmem:[#allocation8 + $0x60] sm:$0xff]
    %v294 = vld [vmem:[#allocation8 + $0x68] sm:$0xff]
    %v295 = vld [vmem:[#allocation8 + $0x70] sm:$0xff]
    %v296 = vld [vmem:[#allocation8 + $0x78] sm:$0xff]
    %v297 = vld [vmem:[#allocation8 + $0x80] sm:$0xff]
    %v298 = vld [vmem:[#allocation8 + $0x88] sm:$0xff]
    %v299 = vld [vmem:[#allocation8 + $0x90] sm:$0xff]
    %v300 = vld [vmem:[#allocation8 + $0x98] sm:$0xff]
    %v301 = vld [vmem:[#allocation8 + $0xa0] sm:$0xff]
    %v302 = vld [vmem:[#allocation8 + $0xa8] sm:$0xff]
    %v303 = vld [vmem:[#allocation8 + $0xb0] sm:$0xff]
    %v304 = vld [vmem:[#allocation8 + $0xb8] sm:$0xff]
    %v305 = vld [vmem:[#allocation8 + $0xc0] sm:$0xff]
    %v306 = vld [vmem:[#allocation8 + $0xc8] sm:$0xff]
    %v307 = vld [vmem:[#allocation8 + $0xd0] sm:$0xff]
    %v308 = vld [vmem:[#allocation8 + $0xd8] sm:$0xff]
    %v309 = vld [vmem:[#allocation8 + $0xe0] sm:$0xff]
    %v310 = vld [vmem:[#allocation8 + $0xe8] sm:$0xff]
    %v311 = vld [vmem:[#allocation8 + $0xf0] sm:$0xff]
    %v312 = vld [vmem:[#allocation8 + $0xf8] sm:$0xff]
    %v313 = vld [vmem:[#allocation8 + $0x100] sm:$0xff]
    %v314 = vld [vmem:[#allocation8 + $0x108] sm:$0xff]
    %v315 = vld [vmem:[#allocation8 + $0x110] sm:$0xff]
    %v316 = vld [vmem:[#allocation8 + $0x118] sm:$0xff]
    %v317 = vld [vmem:[#allocation8 + $0x120] sm:$0xff]
    %v318 = vld [vmem:[#allocation8 + $0x128] sm:$0xff]
    %v319 = vld [vmem:[#allocation8 + $0x130] sm:$0xff]
    %v320 = vld [vmem:[#allocation8 + $0x138] sm:$0xff]
    %v321 = vld [vmem:[#allocation8 + $0x140] sm:$0xff]
    %v322 = vld [vmem:[#allocation8 + $0x148] sm:$0xff]
    %v323 = vld [vmem:[#allocation8 + $0x150] sm:$0xff]
    %v324 = vld [vmem:[#allocation8 + $0x158] sm:$0xff]
    %v325 = vld [vmem:[#allocation8 + $0x160] sm:$0xff]
    %v326 = vld [vmem:[#allocation8 + $0x168] sm:$0xff]
    %v327 = vld [vmem:[#allocation8 + $0x170] sm:$0xff]
    %v328 = vld [vmem:[#allocation8 + $0x178] sm:$0xff]
    %v329 = vld [vmem:[#allocation8 + $0x180] sm:$0xff]
    %v330 = vld [vmem:[#allocation8 + $0x188] sm:$0xff]
    %v331 = vld [vmem:[#allocation8 + $0x190] sm:$0xff]
    %v332 = vld [vmem:[#allocation8 + $0x198] sm:$0xff]
    %v333 = vld [vmem:[#allocation8 + $0x1a0] sm:$0xff]
    %v334 = vld [vmem:[#allocation8 + $0x1a8] sm:$0xff]
    %v335 = vld [vmem:[#allocation8 + $0x1b0] sm:$0xff]
    %v336 = vld [vmem:[#allocation8 + $0x1b8] sm:$0xff]
    %v337 = vld [vmem:[#allocation8 + $0x1c0] sm:$0xff]
    %v338 = vld [vmem:[#allocation8 + $0x1c8] sm:$0xff]
    %v339 = vld [vmem:[#allocation8 + $0x1d0] sm:$0xff]
    %v340 = vld [vmem:[#allocation8 + $0x1d8] sm:$0xff]
    %v341 = vld [vmem:[#allocation8 + $0x1e0] sm:$0xff]
    %v342 = vld [vmem:[#allocation8 + $0x1e8] sm:$0xff]
    %v343 = vld [vmem:[#allocation8 + $0x1f0] sm:$0xff]
    %v344 = vld [vmem:[#allocation8 + $0x1f8] sm:$0xff]
    %v345 = vld [vmem:[#allocation8 + $0x200] sm:$0xff]
    %v346 = vld [vmem:[#allocation8 + $0x208] sm:$0xff]
    %v347 = vld [vmem:[#allocation8 + $0x210] sm:$0xff]
    %v348 = vld [vmem:[#allocation8 + $0x218] sm:$0xff]
    %v349 = vld [vmem:[#allocation8 + $0x220] sm:$0xff]
    %v350 = vld [vmem:[#allocation8 + $0x228] sm:$0xff]
    %v351 = vld [vmem:[#allocation8 + $0x230] sm:$0xff]
    %v352 = vld [vmem:[#allocation8 + $0x238] sm:$0xff]
    %v353 = vld [vmem:[#allocation8 + $0x240] sm:$0xff]
    %v354 = vld [vmem:[#allocation8 + $0x248] sm:$0xff]
    %v355 = vld [vmem:[#allocation8 + $0x250] sm:$0xff]
    %v356 = vld [vmem:[#allocation8 + $0x258] sm:$0xff]
    %v357 = vld [vmem:[#allocation8 + $0x260] sm:$0xff]
    %v358 = vld [vmem:[#allocation8 + $0x268] sm:$0xff]
    %v359 = vld [vmem:[#allocation8 + $0x270] sm:$0xff]
    %v360 = vld [vmem:[#allocation8 + $0x278] sm:$0xff]
    %v361 = vld [vmem:[#allocation8 + $0x280] sm:$0xff]
    %v362 = vld [vmem:[#allocation8 + $0x288] sm:$0xff]
    %v363 = vld [vmem:[#allocation8 + $0x290] sm:$0xff]
    %v364 = vld [vmem:[#allocation8 + $0x298] sm:$0xff]
    %v365 = vld [vmem:[#allocation8 + $0x2a0] sm:$0xff]
    %v366 = vld [vmem:[#allocation8 + $0x2a8] sm:$0xff]
    %v367 = vld [vmem:[#allocation8 + $0x2b0] sm:$0xff]
    %v368 = vld [vmem:[#allocation8 + $0x2b8] sm:$0xff]
    %v369 = vld [vmem:[#allocation8 + $0x2c0] sm:$0xff]
    %v370 = vld [vmem:[#allocation8 + $0x2c8] sm:$0xff]
    %v371 = vld [vmem:[#allocation8 + $0x2d0] sm:$0xff]
    %v372 = vld [vmem:[#allocation8 + $0x2d8] sm:$0xff]
    %v373 = vld [vmem:[#allocation8 + $0x2e0] sm:$0xff]
    %v374 = vld [vmem:[#allocation8 + $0x2e8] sm:$0xff]
    %v375 = vld [vmem:[#allocation8 + $0x2f0] sm:$0xff]
    %v376 = vld [vmem:[#allocation8 + $0x2f8] sm:$0xff]
    %v377 = vld [vmem:[#allocation8 + $0x300] sm:$0xff]
    %v378 = vld [vmem:[#allocation8 + $0x308] sm:$0xff]
    %v379 = vld [vmem:[#allocation8 + $0x310] sm:$0xff]
    %v380 = vld [vmem:[#allocation8 + $0x318] sm:$0xff]
    %v381 = vld [vmem:[#allocation8 + $0x320] sm:$0xff]
    %v382 = vld [vmem:[#allocation8 + $0x328] sm:$0xff]
    %v383 = vld [vmem:[#allocation8 + $0x330] sm:$0xff]
    %v384 = vld [vmem:[#allocation8 + $0x338] sm:$0xff]
    %v385 = vld [vmem:[#allocation8 + $0x340] sm:$0xff]
    %v386 = vld [vmem:[#allocation8 + $0x348] sm:$0xff]
    %v387 = vld [vmem:[#allocation8 + $0x350] sm:$0xff]
    %v388 = vld [vmem:[#allocation8 + $0x358] sm:$0xff]
    %v389 = vld [vmem:[#allocation8 + $0x360] sm:$0xff]
    %v390 = vld [vmem:[#allocation8 + $0x368] sm:$0xff]
    %v391 = vld [vmem:[#allocation8 + $0x370] sm:$0xff]
    %v392 = vld [vmem:[#allocation8 + $0x378] sm:$0xff]
    %v393 = vld [vmem:[#allocation8 + $0x380] sm:$0xff]
    %v394 = vld [vmem:[#allocation8 + $0x388] sm:$0xff]
    %v395 = vld [vmem:[#allocation8 + $0x390] sm:$0xff]
    %v396 = vld [vmem:[#allocation8 + $0x398] sm:$0xff]
    %v397 = vld [vmem:[#allocation8 + $0x3a0] sm:$0xff]
    %v398 = vld [vmem:[#allocation8 + $0x3a8] sm:$0xff]
    %v399 = vld [vmem:[#allocation8 + $0x3b0] sm:$0xff]
    %v400 = vld [vmem:[#allocation8 + $0x3b8] sm:$0xff]
    %v401 = vld [vmem:[#allocation8 + $0x3c0] sm:$0xff]
    %v402 = vld [vmem:[#allocation8 + $0x3c8] sm:$0xff]
    %v403 = vld [vmem:[#allocation8 + $0x3d0] sm:$0xff]
    %v404 = vld [vmem:[#allocation8 + $0x3d8] sm:$0xff]
    %v405 = vld [vmem:[#allocation8 + $0x3e0] sm:$0xff]
    %v406 = vld [vmem:[#allocation8 + $0x3e8] sm:$0xff]
    %v407 = vld [vmem:[#allocation8 + $0x3f0] sm:$0xff]
    %v408 = vld [vmem:[#allocation8 + $0x3f8] sm:$0xff]
    %v409 = vld [vmem:[#allocation10] sm:$0xf]
    %v411 = vlaneseq
    %v412 = vshrl.u32 %v411, 7
    %v413 = vsub.s32 0, %v412
    %v414 = vrot.slane %v409, %v413
    %v415 = vlaneseq
    %v416 = vshrl.u32 %v415, 7
    %v417 = vsub.s32 1, %v416
    %v418 = vrot.slane %v409, %v417
    %v419 = vlaneseq
    %v420 = vshrl.u32 %v419, 7
    %v421 = vsub.s32 2, %v420
    %v422 = vrot.slane %v409, %v421
    %v423 = vlaneseq
    %v424 = vshrl.u32 %v423, 7
    %v425 = vsub.s32 3, %v424
    %v426 = vrot.slane %v409, %v425
    %v559 = vunpack.c.l.b16 %v281
    %v560 = vunpack.c.h.b16 %v281
    %v561 = vunpack.c.l.b16 %v282
    %v562 = vunpack.c.h.b16 %v282
    %v563 = vunpack.c.l.b16 %v283
    %v564 = vunpack.c.h.b16 %v283
    %v565 = vunpack.c.l.b16 %v284
    %v566 = vunpack.c.h.b16 %v284
    %v567 = vunpack.c.l.b16 %v285
    %v568 = vunpack.c.h.b16 %v285
    %v569 = vunpack.c.l.b16 %v286
    %v570 = vunpack.c.h.b16 %v286
    %v571 = vunpack.c.l.b16 %v287
    %v572 = vunpack.c.h.b16 %v287
    %v573 = vunpack.c.l.b16 %v288
    %v574 = vunpack.c.h.b16 %v288
    %v575 = vunpack.c.l.b16 %v289
    %v576 = vunpack.c.h.b16 %v289
    %v577 = vunpack.c.l.b16 %v290
    %v578 = vunpack.c.h.b16 %v290
    %v579 = vunpack.c.l.b16 %v291
    %v580 = vunpack.c.h.b16 %v291
    %v581 = vunpack.c.l.b16 %v292
    %v582 = vunpack.c.h.b16 %v292
    %v583 = vunpack.c.l.b16 %v293
    %v584 = vunpack.c.h.b16 %v293
    %v585 = vunpack.c.l.b16 %v294
    %v586 = vunpack.c.h.b16 %v294
    %v587 = vunpack.c.l.b16 %v295
    %v588 = vunpack.c.h.b16 %v295
    %v589 = vunpack.c.l.b16 %v296
    %v590 = vunpack.c.h.b16 %v296
    %v591 = vunpack.c.l.b16 %v297
    %v592 = vunpack.c.h.b16 %v297
    %v593 = vunpack.c.l.b16 %v298
    %v594 = vunpack.c.h.b16 %v298
    %v595 = vunpack.c.l.b16 %v299
    %v596 = vunpack.c.h.b16 %v299
    %v597 = vunpack.c.l.b16 %v300
    %v598 = vunpack.c.h.b16 %v300
    %v599 = vunpack.c.l.b16 %v301
    %v600 = vunpack.c.h.b16 %v301
    %v601 = vunpack.c.l.b16 %v302
    %v602 = vunpack.c.h.b16 %v302
    %v603 = vunpack.c.l.b16 %v303
    %v604 = vunpack.c.h.b16 %v303
    %v605 = vunpack.c.l.b16 %v304
    %v606 = vunpack.c.h.b16 %v304
    %v607 = vunpack.c.l.b16 %v305
    %v608 = vunpack.c.h.b16 %v305
    %v609 = vunpack.c.l.b16 %v306
    %v610 = vunpack.c.h.b16 %v306
    %v611 = vunpack.c.l.b16 %v307
    %v612 = vunpack.c.h.b16 %v307
    %v613 = vunpack.c.l.b16 %v308
    %v614 = vunpack.c.h.b16 %v308
    %v615 = vunpack.c.l.b16 %v309
    %v616 = vunpack.c.h.b16 %v309
    %v617 = vunpack.c.l.b16 %v310
    %v618 = vunpack.c.h.b16 %v310
    %v619 = vunpack.c.l.b16 %v311
    %v620 = vunpack.c.h.b16 %v311
    %v621 = vunpack.c.l.b16 %v312
    %v622 = vunpack.c.h.b16 %v312
    %v623 = vunpack.c.l.b16 %v313
    %v624 = vunpack.c.h.b16 %v313
    %v625 = vunpack.c.l.b16 %v314
    %v626 = vunpack.c.h.b16 %v314
    %v627 = vunpack.c.l.b16 %v315
    %v628 = vunpack.c.h.b16 %v315
    %v629 = vunpack.c.l.b16 %v316
    %v630 = vunpack.c.h.b16 %v316
    %v631 = vunpack.c.l.b16 %v317
    %v632 = vunpack.c.h.b16 %v317
    %v633 = vunpack.c.l.b16 %v318
    %v634 = vunpack.c.h.b16 %v318
    %v635 = vunpack.c.l.b16 %v319
    %v636 = vunpack.c.h.b16 %v319
    %v637 = vunpack.c.l.b16 %v320
    %v638 = vunpack.c.h.b16 %v320
    %v639 = vunpack.c.l.b16 %v321
    %v640 = vunpack.c.h.b16 %v321
    %v641 = vunpack.c.l.b16 %v322
    %v642 = vunpack.c.h.b16 %v322
    %v643 = vunpack.c.l.b16 %v323
    %v644 = vunpack.c.h.b16 %v323
    %v645 = vunpack.c.l.b16 %v324
    %v646 = vunpack.c.h.b16 %v324
    %v647 = vunpack.c.l.b16 %v325
    %v648 = vunpack.c.h.b16 %v325
    %v649 = vunpack.c.l.b16 %v326
    %v650 = vunpack.c.h.b16 %v326
    %v651 = vunpack.c.l.b16 %v327
    %v652 = vunpack.c.h.b16 %v327
    %v653 = vunpack.c.l.b16 %v328
    %v654 = vunpack.c.h.b16 %v328
    %v655 = vunpack.c.l.b16 %v329
    %v656 = vunpack.c.h.b16 %v329
    %v657 = vunpack.c.l.b16 %v330
    %v658 = vunpack.c.h.b16 %v330
    %v659 = vunpack.c.l.b16 %v331
    %v660 = vunpack.c.h.b16 %v331
    %v661 = vunpack.c.l.b16 %v332
    %v662 = vunpack.c.h.b16 %v332
    %v663 = vunpack.c.l.b16 %v333
    %v664 = vunpack.c.h.b16 %v333
    %v665 = vunpack.c.l.b16 %v334
    %v666 = vunpack.c.h.b16 %v334
    %v667 = vunpack.c.l.b16 %v335
    %v668 = vunpack.c.h.b16 %v335
    %v669 = vunpack.c.l.b16 %v336
    %v670 = vunpack.c.h.b16 %v336
    %v671 = vunpack.c.l.b16 %v337
    %v672 = vunpack.c.h.b16 %v337
    %v673 = vunpack.c.l.b16 %v338
    %v674 = vunpack.c.h.b16 %v338
    %v675 = vunpack.c.l.b16 %v339
    %v676 = vunpack.c.h.b16 %v339
    %v677 = vunpack.c.l.b16 %v340
    %v678 = vunpack.c.h.b16 %v340
    %v679 = vunpack.c.l.b16 %v341
    %v680 = vunpack.c.h.b16 %v341
    %v681 = vunpack.c.l.b16 %v342
    %v682 = vunpack.c.h.b16 %v342
    %v683 = vunpack.c.l.b16 %v343
    %v684 = vunpack.c.h.b16 %v343
    %v685 = vunpack.c.l.b16 %v344
    %v686 = vunpack.c.h.b16 %v344
    %v687 = vunpack.c.l.b16 %v345
    %v688 = vunpack.c.h.b16 %v345
    %v689 = vunpack.c.l.b16 %v346
    %v690 = vunpack.c.h.b16 %v346
    %v691 = vunpack.c.l.b16 %v347
    %v692 = vunpack.c.h.b16 %v347
    %v693 = vunpack.c.l.b16 %v348
    %v694 = vunpack.c.h.b16 %v348
    %v695 = vunpack.c.l.b16 %v349
    %v696 = vunpack.c.h.b16 %v349
    %v697 = vunpack.c.l.b16 %v350
    %v698 = vunpack.c.h.b16 %v350
    %v699 = vunpack.c.l.b16 %v351
    %v700 = vunpack.c.h.b16 %v351
    %v701 = vunpack.c.l.b16 %v352
    %v702 = vunpack.c.h.b16 %v352
    %v703 = vunpack.c.l.b16 %v353
    %v704 = vunpack.c.h.b16 %v353
    %v705 = vunpack.c.l.b16 %v354
    %v706 = vunpack.c.h.b16 %v354
    %v707 = vunpack.c.l.b16 %v355
    %v708 = vunpack.c.h.b16 %v355
    %v709 = vunpack.c.l.b16 %v356
    %v710 = vunpack.c.h.b16 %v356
    %v711 = vunpack.c.l.b16 %v357
    %v712 = vunpack.c.h.b16 %v357
    %v713 = vunpack.c.l.b16 %v358
    %v714 = vunpack.c.h.b16 %v358
    %v715 = vunpack.c.l.b16 %v359
    %v716 = vunpack.c.h.b16 %v359
    %v717 = vunpack.c.l.b16 %v360
    %v718 = vunpack.c.h.b16 %v360
    %v719 = vunpack.c.l.b16 %v361
    %v720 = vunpack.c.h.b16 %v361
    %v721 = vunpack.c.l.b16 %v362
    %v722 = vunpack.c.h.b16 %v362
    %v723 = vunpack.c.l.b16 %v363
    %v724 = vunpack.c.h.b16 %v363
    %v725 = vunpack.c.l.b16 %v364
    %v726 = vunpack.c.h.b16 %v364
    %v727 = vunpack.c.l.b16 %v365
    %v728 = vunpack.c.h.b16 %v365
    %v729 = vunpack.c.l.b16 %v366
    %v730 = vunpack.c.h.b16 %v366
    %v731 = vunpack.c.l.b16 %v367
    %v732 = vunpack.c.h.b16 %v367
    %v733 = vunpack.c.l.b16 %v368
    %v734 = vunpack.c.h.b16 %v368
    %v735 = vunpack.c.l.b16 %v369
    %v736 = vunpack.c.h.b16 %v369
    %v737 = vunpack.c.l.b16 %v370
    %v738 = vunpack.c.h.b16 %v370
    %v739 = vunpack.c.l.b16 %v371
    %v740 = vunpack.c.h.b16 %v371
    %v741 = vunpack.c.l.b16 %v372
    %v742 = vunpack.c.h.b16 %v372
    %v743 = vunpack.c.l.b16 %v373
    %v744 = vunpack.c.h.b16 %v373
    %v745 = vunpack.c.l.b16 %v374
    %v746 = vunpack.c.h.b16 %v374
    %v747 = vunpack.c.l.b16 %v375
    %v748 = vunpack.c.h.b16 %v375
    %v749 = vunpack.c.l.b16 %v376
    %v750 = vunpack.c.h.b16 %v376
    %v751 = vunpack.c.l.b16 %v377
    %v752 = vunpack.c.h.b16 %v377
    %v753 = vunpack.c.l.b16 %v378
    %v754 = vunpack.c.h.b16 %v378
    %v755 = vunpack.c.l.b16 %v379
    %v756 = vunpack.c.h.b16 %v379
    %v757 = vunpack.c.l.b16 %v380
    %v758 = vunpack.c.h.b16 %v380
    %v759 = vunpack.c.l.b16 %v381
    %v760 = vunpack.c.h.b16 %v381
    %v761 = vunpack.c.l.b16 %v382
    %v762 = vunpack.c.h.b16 %v382
    %v763 = vunpack.c.l.b16 %v383
    %v764 = vunpack.c.h.b16 %v383
    %v765 = vunpack.c.l.b16 %v384
    %v766 = vunpack.c.h.b16 %v384
    %v767 = vunpack.c.l.b16 %v385
    %v768 = vunpack.c.h.b16 %v385
    %v769 = vunpack.c.l.b16 %v386
    %v770 = vunpack.c.h.b16 %v386
    %v771 = vunpack.c.l.b16 %v387
    %v772 = vunpack.c.h.b16 %v387
    %v773 = vunpack.c.l.b16 %v388
    %v774 = vunpack.c.h.b16 %v388
    %v775 = vunpack.c.l.b16 %v389
    %v776 = vunpack.c.h.b16 %v389
    %v777 = vunpack.c.l.b16 %v390
    %v778 = vunpack.c.h.b16 %v390
    %v779 = vunpack.c.l.b16 %v391
    %v780 = vunpack.c.h.b16 %v391
    %v781 = vunpack.c.l.b16 %v392
    %v782 = vunpack.c.h.b16 %v392
    %v783 = vunpack.c.l.b16 %v393
    %v784 = vunpack.c.h.b16 %v393
    %v785 = vunpack.c.l.b16 %v394
    %v786 = vunpack.c.h.b16 %v394
    %v787 = vunpack.c.l.b16 %v395
    %v788 = vunpack.c.h.b16 %v395
    %v789 = vunpack.c.l.b16 %v396
    %v790 = vunpack.c.h.b16 %v396
    %v791 = vunpack.c.l.b16 %v397
    %v792 = vunpack.c.h.b16 %v397
    %v793 = vunpack.c.l.b16 %v398
    %v794 = vunpack.c.h.b16 %v398
    %v795 = vunpack.c.l.b16 %v399
    %v796 = vunpack.c.h.b16 %v399
    %v797 = vunpack.c.l.b16 %v400
    %v798 = vunpack.c.h.b16 %v400
    %v799 = vunpack.c.l.b16 %v401
    %v800 = vunpack.c.h.b16 %v401
    %v801 = vunpack.c.l.b16 %v402
    %v802 = vunpack.c.h.b16 %v402
    %v803 = vunpack.c.l.b16 %v403
    %v804 = vunpack.c.h.b16 %v403
    %v805 = vunpack.c.l.b16 %v404
    %v806 = vunpack.c.h.b16 %v404
    %v807 = vunpack.c.l.b16 %v405
    %v808 = vunpack.c.h.b16 %v405
    %v809 = vunpack.c.l.b16 %v406
    %v810 = vunpack.c.h.b16 %v406
    %v811 = vunpack.c.l.b16 %v407
    %v812 = vunpack.c.h.b16 %v407
    %v813 = vunpack.c.l.b16 %v408
    %v814 = vunpack.c.h.b16 %v408
    %v815 = vpack.c.b16 %v563, %v559
    %v816 = vpack.c.b16 %v564, %v560
    %v817 = vpack.c.b16 %v565, %v561
    %v818 = vpack.c.b16 %v566, %v562
    %v819 = vpack.c.b16 %v571, %v567
    %v820 = vpack.c.b16 %v572, %v568
    %v821 = vpack.c.b16 %v573, %v569
    %v822 = vpack.c.b16 %v574, %v570
    %v823 = vpack.c.b16 %v579, %v575
    %v824 = vpack.c.b16 %v580, %v576
    %v825 = vpack.c.b16 %v581, %v577
    %v826 = vpack.c.b16 %v582, %v578
    %v827 = vpack.c.b16 %v587, %v583
    %v828 = vpack.c.b16 %v588, %v584
    %v829 = vpack.c.b16 %v589, %v585
    %v830 = vpack.c.b16 %v590, %v586
    %v831 = vpack.c.b16 %v595, %v591
    %v832 = vpack.c.b16 %v596, %v592
    %v833 = vpack.c.b16 %v597, %v593
    %v834 = vpack.c.b16 %v598, %v594
    %v835 = vpack.c.b16 %v603, %v599
    %v836 = vpack.c.b16 %v604, %v600
    %v837 = vpack.c.b16 %v605, %v601
    %v838 = vpack.c.b16 %v606, %v602
    %v839 = vpack.c.b16 %v611, %v607
    %v840 = vpack.c.b16 %v612, %v608
    %v841 = vpack.c.b16 %v613, %v609
    %v842 = vpack.c.b16 %v614, %v610
    %v843 = vpack.c.b16 %v619, %v615
    %v844 = vpack.c.b16 %v620, %v616
    %v845 = vpack.c.b16 %v621, %v617
    %v846 = vpack.c.b16 %v622, %v618
    %v847 = vpack.c.b16 %v627, %v623
    %v848 = vpack.c.b16 %v628, %v624
    %v849 = vpack.c.b16 %v629, %v625
    %v850 = vpack.c.b16 %v630, %v626
    %v851 = vpack.c.b16 %v635, %v631
    %v852 = vpack.c.b16 %v636, %v632
    %v853 = vpack.c.b16 %v637, %v633
    %v854 = vpack.c.b16 %v638, %v634
    %v855 = vpack.c.b16 %v643, %v639
    %v856 = vpack.c.b16 %v644, %v640
    %v857 = vpack.c.b16 %v645, %v641
    %v858 = vpack.c.b16 %v646, %v642
    %v859 = vpack.c.b16 %v651, %v647
    %v860 = vpack.c.b16 %v652, %v648
    %v861 = vpack.c.b16 %v653, %v649
    %v862 = vpack.c.b16 %v654, %v650
    %v863 = vpack.c.b16 %v659, %v655
    %v864 = vpack.c.b16 %v660, %v656
    %v865 = vpack.c.b16 %v661, %v657
    %v866 = vpack.c.b16 %v662, %v658
    %v867 = vpack.c.b16 %v667, %v663
    %v868 = vpack.c.b16 %v668, %v664
    %v869 = vpack.c.b16 %v669, %v665
    %v870 = vpack.c.b16 %v670, %v666
    %v871 = vpack.c.b16 %v675, %v671
    %v872 = vpack.c.b16 %v676, %v672
    %v873 = vpack.c.b16 %v677, %v673
    %v874 = vpack.c.b16 %v678, %v674
    %v875 = vpack.c.b16 %v683, %v679
    %v876 = vpack.c.b16 %v684, %v680
    %v877 = vpack.c.b16 %v685, %v681
    %v878 = vpack.c.b16 %v686, %v682
    %v879 = vpack.c.b16 %v691, %v687
    %v880 = vpack.c.b16 %v692, %v688
    %v881 = vpack.c.b16 %v693, %v689
    %v882 = vpack.c.b16 %v694, %v690
    %v883 = vpack.c.b16 %v699, %v695
    %v884 = vpack.c.b16 %v700, %v696
    %v885 = vpack.c.b16 %v701, %v697
    %v886 = vpack.c.b16 %v702, %v698
    %v887 = vpack.c.b16 %v707, %v703
    %v888 = vpack.c.b16 %v708, %v704
    %v889 = vpack.c.b16 %v709, %v705
    %v890 = vpack.c.b16 %v710, %v706
    %v891 = vpack.c.b16 %v715, %v711
    %v892 = vpack.c.b16 %v716, %v712
    %v893 = vpack.c.b16 %v717, %v713
    %v894 = vpack.c.b16 %v718, %v714
    %v895 = vpack.c.b16 %v723, %v719
    %v896 = vpack.c.b16 %v724, %v720
    %v897 = vpack.c.b16 %v725, %v721
    %v898 = vpack.c.b16 %v726, %v722
    %v899 = vpack.c.b16 %v731, %v727
    %v900 = vpack.c.b16 %v732, %v728
    %v901 = vpack.c.b16 %v733, %v729
    %v902 = vpack.c.b16 %v734, %v730
    %v903 = vpack.c.b16 %v739, %v735
    %v904 = vpack.c.b16 %v740, %v736
    %v905 = vpack.c.b16 %v741, %v737
    %v906 = vpack.c.b16 %v742, %v738
    %v907 = vpack.c.b16 %v747, %v743
    %v908 = vpack.c.b16 %v748, %v744
    %v909 = vpack.c.b16 %v749, %v745
    %v910 = vpack.c.b16 %v750, %v746
    %v911 = vpack.c.b16 %v755, %v751
    %v912 = vpack.c.b16 %v756, %v752
    %v913 = vpack.c.b16 %v757, %v753
    %v914 = vpack.c.b16 %v758, %v754
    %v915 = vpack.c.b16 %v763, %v759
    %v916 = vpack.c.b16 %v764, %v760
    %v917 = vpack.c.b16 %v765, %v761
    %v918 = vpack.c.b16 %v766, %v762
    %v919 = vpack.c.b16 %v771, %v767
    %v920 = vpack.c.b16 %v772, %v768
    %v921 = vpack.c.b16 %v773, %v769
    %v922 = vpack.c.b16 %v774, %v770
    %v923 = vpack.c.b16 %v779, %v775
    %v924 = vpack.c.b16 %v780, %v776
    %v925 = vpack.c.b16 %v781, %v777
    %v926 = vpack.c.b16 %v782, %v778
    %v927 = vpack.c.b16 %v787, %v783
    %v928 = vpack.c.b16 %v788, %v784
    %v929 = vpack.c.b16 %v789, %v785
    %v930 = vpack.c.b16 %v790, %v786
    %v931 = vpack.c.b16 %v795, %v791
    %v932 = vpack.c.b16 %v796, %v792
    %v933 = vpack.c.b16 %v797, %v793
    %v934 = vpack.c.b16 %v798, %v794
    %v935 = vpack.c.b16 %v803, %v799
    %v936 = vpack.c.b16 %v804, %v800
    %v937 = vpack.c.b16 %v805, %v801
    %v938 = vpack.c.b16 %v806, %v802
    %v939 = vpack.c.b16 %v811, %v807
    %v940 = vpack.c.b16 %v812, %v808
    %v941 = vpack.c.b16 %v813, %v809
    %v942 = vpack.c.b16 %v814, %v810
    %1071 = vmatprep.subr.bf16.mxu0 %v816
    %1072 = vmatpush1.bf16.msra.mxu0 %v815
    %1073 = vmatprep.subr.bf16.mxu0 %v820
    %1074 = vmatpush1.bf16.msra.mxu0 %v819
    %1075 = vmatprep.subr.bf16.mxu0 %v824
    %1076 = vmatpush1.bf16.msra.mxu0 %v823
    %1077 = vmatprep.subr.bf16.mxu0 %v828
    %1078 = vmatpush1.bf16.msra.mxu0 %v827
    %1079 = vmatprep.subr.bf16.mxu0 %v832
    %1080 = vmatpush1.bf16.msra.mxu0 %v831
    %1081 = vmatprep.subr.bf16.mxu0 %v836
    %1082 = vmatpush1.bf16.msra.mxu0 %v835
    %1083 = vmatprep.subr.bf16.mxu0 %v840
    %1084 = vmatpush1.bf16.msra.mxu0 %v839
    %1085 = vmatprep.subr.bf16.mxu0 %v844
    %1086 = vmatpush1.bf16.msra.mxu0 %v843
    %1087 = vmatprep.subr.bf16.mxu0 %v848
    %1088 = vmatpush1.bf16.msra.mxu0 %v847
    %1089 = vmatprep.subr.bf16.mxu0 %v852
    %1090 = vmatpush1.bf16.msra.mxu0 %v851
    %1091 = vmatprep.subr.bf16.mxu0 %v856
    %1092 = vmatpush1.bf16.msra.mxu0 %v855
    %1093 = vmatprep.subr.bf16.mxu0 %v860
    %1094 = vmatpush1.bf16.msra.mxu0 %v859
    %1095 = vmatprep.subr.bf16.mxu0 %v864
    %1096 = vmatpush1.bf16.msra.mxu0 %v863
    %1097 = vmatprep.subr.bf16.mxu0 %v868
    %1098 = vmatpush1.bf16.msra.mxu0 %v867
    %1099 = vmatprep.subr.bf16.mxu0 %v872
    %1100 = vmatpush1.bf16.msra.mxu0 %v871
    %1101 = vmatprep.subr.bf16.mxu0 %v876
    %1102 = vmatpush1.bf16.msra.mxu0 %v875
    %1103 = vmatprep.mubr.bf16.mxu0 %v278
    %1104 = vmatmul.mubr.bf16.gmra.mrb[0].mxu0 %v277
    %v1105 = vpop.f32.mrb[0].mxu0
    %v1106 = vadd.f32 %v414, %v1105
    %v1107 = vpop.f32.mrb[0].mxu0
    %v1108 = vadd.f32 %v418, %v1107
    %v1109 = vpop.f32.mrb[0].mxu0
    %v1110 = vpop.f32.mrb[0].mxu0
    %1111 = vdwg.mxu0
    %1112 = vmatprep.subr.bf16.mxu0 %v880
    %1113 = vmatpush1.bf16.msra.mxu0 %v879
    %1114 = vmatprep.subr.bf16.mxu0 %v884
    %1115 = vmatpush1.bf16.msra.mxu0 %v883
    %1116 = vmatprep.subr.bf16.mxu0 %v888
    %1117 = vmatpush1.bf16.msra.mxu0 %v887
    %1118 = vmatprep.subr.bf16.mxu0 %v892
    %1119 = vmatpush1.bf16.msra.mxu0 %v891
    %1120 = vmatprep.subr.bf16.mxu0 %v896
    %1121 = vmatpush1.bf16.msra.mxu0 %v895
    %1122 = vmatprep.subr.bf16.mxu0 %v900
    %1123 = vmatpush1.bf16.msra.mxu0 %v899
    %1124 = vmatprep.subr.bf16.mxu0 %v904
    %1125 = vmatpush1.bf16.msra.mxu0 %v903
    %1126 = vmatprep.subr.bf16.mxu0 %v908
    %1127 = vmatpush1.bf16.msra.mxu0 %v907
    %1128 = vmatprep.subr.bf16.mxu0 %v912
    %1129 = vmatpush1.bf16.msra.mxu0 %v911
    %1130 = vmatprep.subr.bf16.mxu0 %v916
    %1131 = vmatpush1.bf16.msra.mxu0 %v915
    %1132 = vmatprep.subr.bf16.mxu0 %v920
    %1133 = vmatpush1.bf16.msra.mxu0 %v919
    %1134 = vmatprep.subr.bf16.mxu0 %v924
    %1135 = vmatpush1.bf16.msra.mxu0 %v923
    %1136 = vmatprep.subr.bf16.mxu0 %v928
    %1137 = vmatpush1.bf16.msra.mxu0 %v927
    %1138 = vmatprep.subr.bf16.mxu0 %v932
    %1139 = vmatpush1.bf16.msra.mxu0 %v931
    %1140 = vmatprep.subr.bf16.mxu0 %v936
    %1141 = vmatpush1.bf16.msra.mxu0 %v935
    %1142 = vmatprep.subr.bf16.mxu0 %v940
    %1143 = vmatpush1.bf16.msra.mxu0 %v939
    %1144 = vmatprep.mubr.bf16.mxu0 %v280
    %1145 = vmatmul.mubr.bf16.gmra.mrb[0].mxu0 %v279
    %v1146 = vpop.f32.mrb[0].mxu0
    %v1147 = vadd.f32 %v1106, %v1146
    %v1148 = vpop.f32.mrb[0].mxu0
    %v1149 = vadd.f32 %v1108, %v1148
    %v1150 = vpop.f32.mrb[0].mxu0
    %v1151 = vpop.f32.mrb[0].mxu0
    %1152 = vdwg.mxu0
    %1153 = vmatprep.subr.bf16.mxu0 %v818
    %1154 = vmatpush1.bf16.msra.mxu0 %v817
    %1155 = vmatprep.subr.bf16.mxu0 %v822
    %1156 = vmatpush1.bf16.msra.mxu0 %v821
    %1157 = vmatprep.subr.bf16.mxu0 %v826
    %1158 = vmatpush1.bf16.msra.mxu0 %v825
    %1159 = vmatprep.subr.bf16.mxu0 %v830
    %1160 = vmatpush1.bf16.msra.mxu0 %v829
    %1161 = vmatprep.subr.bf16.mxu0 %v834
    %1162 = vmatpush1.bf16.msra.mxu0 %v833
    %1163 = vmatprep.subr.bf16.mxu0 %v838
    %1164 = vmatpush1.bf16.msra.mxu0 %v837
    %1165 = vmatprep.subr.bf16.mxu0 %v842
    %1166 = vmatpush1.bf16.msra.mxu0 %v841
    %1167 = vmatprep.subr.bf16.mxu0 %v846
    %1168 = vmatpush1.bf16.msra.mxu0 %v845
    %1169 = vmatprep.subr.bf16.mxu0 %v850
    %1170 = vmatpush1.bf16.msra.mxu0 %v849
    %1171 = vmatprep.subr.bf16.mxu0 %v854
    %1172 = vmatpush1.bf16.msra.mxu0 %v853
    %1173 = vmatprep.subr.bf16.mxu0 %v858
    %1174 = vmatpush1.bf16.msra.mxu0 %v857
    %1175 = vmatprep.subr.bf16.mxu0 %v862
    %1176 = vmatpush1.bf16.msra.mxu0 %v861
    %1177 = vmatprep.subr.bf16.mxu0 %v866
    %1178 = vmatpush1.bf16.msra.mxu0 %v865
    %1179 = vmatprep.subr.bf16.mxu0 %v870
    %1180 = vmatpush1.bf16.msra.mxu0 %v869
    %1181 = vmatprep.subr.bf16.mxu0 %v874
    %1182 = vmatpush1.bf16.msra.mxu0 %v873
    %1183 = vmatprep.subr.bf16.mxu0 %v878
    %1184 = vmatpush1.bf16.msra.mxu0 %v877
    %1185 = vmatprep.mubr.bf16.mxu0 %v278
    %1186 = vmatmul.mubr.bf16.gmra.mrb[0].mxu0 %v277
    %v1187 = vpop.f32.mrb[0].mxu0
    %v1188 = vadd.f32 %v422, %v1187
    %v1189 = vpop.f32.mrb[0].mxu0
    %v1190 = vadd.f32 %v426, %v1189
    %v1191 = vpop.f32.mrb[0].mxu0
    %v1192 = vpop.f32.mrb[0].mxu0
    %1193 = vdwg.mxu0
    %1194 = vmatprep.subr.bf16.mxu0 %v882
    %1195 = vmatpush1.bf16.msra.mxu0 %v881
    %1196 = vmatprep.subr.bf16.mxu0 %v886
    %1197 = vmatpush1.bf16.msra.mxu0 %v885
    %1198 = vmatprep.subr.bf16.mxu0 %v890
    %1199 = vmatpush1.bf16.msra.mxu0 %v889
    %1200 = vmatprep.subr.bf16.mxu0 %v894
    %1201 = vmatpush1.bf16.msra.mxu0 %v893
    %1202 = vmatprep.subr.bf16.mxu0 %v898
    %1203 = vmatpush1.bf16.msra.mxu0 %v897
    %1204 = vmatprep.subr.bf16.mxu0 %v902
    %1205 = vmatpush1.bf16.msra.mxu0 %v901
    %1206 = vmatprep.subr.bf16.mxu0 %v906
    %1207 = vmatpush1.bf16.msra.mxu0 %v905
    %1208 = vmatprep.subr.bf16.mxu0 %v910
    %1209 = vmatpush1.bf16.msra.mxu0 %v909
    %1210 = vmatprep.subr.bf16.mxu0 %v914
    %1211 = vmatpush1.bf16.msra.mxu0 %v913
    %1212 = vmatprep.subr.bf16.mxu0 %v918
    %1213 = vmatpush1.bf16.msra.mxu0 %v917
    %1214 = vmatprep.subr.bf16.mxu0 %v922
    %1215 = vmatpush1.bf16.msra.mxu0 %v921
    %1216 = vmatprep.subr.bf16.mxu0 %v926
    %1217 = vmatpush1.bf16.msra.mxu0 %v925
    %1218 = vmatprep.subr.bf16.mxu0 %v930
    %1219 = vmatpush1.bf16.msra.mxu0 %v929
    %1220 = vmatprep.subr.bf16.mxu0 %v934
    %1221 = vmatpush1.bf16.msra.mxu0 %v933
    %1222 = vmatprep.subr.bf16.mxu0 %v938
    %1223 = vmatpush1.bf16.msra.mxu0 %v937
    %1224 = vmatprep.subr.bf16.mxu0 %v942
    %1225 = vmatpush1.bf16.msra.mxu0 %v941
    %1226 = vmatprep.mubr.bf16.mxu0 %v280
    %1227 = vmatmul.mubr.bf16.gmra.mrb[0].mxu0 %v279
    %v1228 = vpop.f32.mrb[0].mxu0
    %v1229 = vadd.f32 %v1188, %v1228
    %v1230 = vpop.f32.mrb[0].mxu0
    %v1231 = vadd.f32 %v1190, %v1230
    %v1232 = vpop.f32.mrb[0].mxu0
    %v1233 = vpop.f32.mrb[0].mxu0
    %1234 = vdwg.mxu0
    %v1235 = vmax.f32 %v1147, 0.0
    %v1236 = vmax.f32 %v1149, 0.0
    %v1237 = vmax.f32 %v1229, 0.0
    %v1238 = vmax.f32 %v1231, 0.0
    %v1239 = vpack.c.bf16 %v1235, %v1235
    %v1240 = vpack.c.bf16 %v1236, %v1236
    %v1241 = vpack.c.bf16 %v1237, %v1237
    %v1242 = vpack.c.bf16 %v1238, %v1238
    %v1243 = vld [vmem:[#allocation11] sm:$0xf]
    %v1244 = vld [vmem:[#allocation11 + $0x4] sm:$0xf]
    %v1245 = vld [vmem:[#allocation11 + $0x8] sm:$0xf]
    %v1246 = vld [vmem:[#allocation11 + $0xc] sm:$0xf]
    %v1247 = vld [vmem:[#allocation11 + $0x10] sm:$0xf]
    %v1248 = vld [vmem:[#allocation11 + $0x14] sm:$0xf]
    %v1249 = vld [vmem:[#allocation11 + $0x18] sm:$0xf]
    %v1250 = vld [vmem:[#allocation11 + $0x1c] sm:$0xf]
    %v1251 = vld [vmem:[#allocation11 + $0x20] sm:$0xf]
    %v1252 = vld [vmem:[#allocation11 + $0x24] sm:$0xf]
    %v1253 = vld [vmem:[#allocation11 + $0x28] sm:$0xf]
    %v1254 = vld [vmem:[#allocation11 + $0x2c] sm:$0xf]
    %v1255 = vld [vmem:[#allocation11 + $0x30] sm:$0xf]
    %v1256 = vld [vmem:[#allocation11 + $0x34] sm:$0xf]
    %v1257 = vld [vmem:[#allocation11 + $0x38] sm:$0xf]
    %v1258 = vld [vmem:[#allocation11 + $0x3c] sm:$0xf]
    %v1259 = vld [vmem:[#allocation11 + $0x40] sm:$0xf]
    %v1260 = vld [vmem:[#allocation11 + $0x44] sm:$0xf]
    %v1261 = vld [vmem:[#allocation11 + $0x48] sm:$0xf]
    %v1262 = vld [vmem:[#allocation11 + $0x4c] sm:$0xf]
    %v1263 = vld [vmem:[#allocation11 + $0x50] sm:$0xf]
    %v1264 = vld [vmem:[#allocation11 + $0x54] sm:$0xf]
    %v1265 = vld [vmem:[#allocation11 + $0x58] sm:$0xf]
    %v1266 = vld [vmem:[#allocation11 + $0x5c] sm:$0xf]
    %v1267 = vld [vmem:[#allocation11 + $0x60] sm:$0xf]
    %v1268 = vld [vmem:[#allocation11 + $0x64] sm:$0xf]
    %v1269 = vld [vmem:[#allocation11 + $0x68] sm:$0xf]
    %v1270 = vld [vmem:[#allocation11 + $0x6c] sm:$0xf]
    %v1271 = vld [vmem:[#allocation11 + $0x70] sm:$0xf]
    %v1272 = vld [vmem:[#allocation11 + $0x74] sm:$0xf]
    %v1273 = vld [vmem:[#allocation11 + $0x78] sm:$0xf]
    %v1274 = vld [vmem:[#allocation11 + $0x7c] sm:$0xf]
    %v1275 = vld [vmem:[#allocation11 + $0x80] sm:$0xf]
    %v1276 = vld [vmem:[#allocation11 + $0x84] sm:$0xf]
    %v1277 = vld [vmem:[#allocation11 + $0x88] sm:$0xf]
    %v1278 = vld [vmem:[#allocation11 + $0x8c] sm:$0xf]
    %v1279 = vld [vmem:[#allocation11 + $0x90] sm:$0xf]
    %v1280 = vld [vmem:[#allocation11 + $0x94] sm:$0xf]
    %v1281 = vld [vmem:[#allocation11 + $0x98] sm:$0xf]
    %v1282 = vld [vmem:[#allocation11 + $0x9c] sm:$0xf]
    %v1283 = vld [vmem:[#allocation11 + $0xa0] sm:$0xf]
    %v1284 = vld [vmem:[#allocation11 + $0xa4] sm:$0xf]
    %v1285 = vld [vmem:[#allocation11 + $0xa8] sm:$0xf]
    %v1286 = vld [vmem:[#allocation11 + $0xac] sm:$0xf]
    %v1287 = vld [vmem:[#allocation11 + $0xb0] sm:$0xf]
    %v1288 = vld [vmem:[#allocation11 + $0xb4] sm:$0xf]
    %v1289 = vld [vmem:[#allocation11 + $0xb8] sm:$0xf]
    %v1290 = vld [vmem:[#allocation11 + $0xbc] sm:$0xf]
    %v1291 = vld [vmem:[#allocation11 + $0xc0] sm:$0xf]
    %v1292 = vld [vmem:[#allocation11 + $0xc4] sm:$0xf]
    %v1293 = vld [vmem:[#allocation11 + $0xc8] sm:$0xf]
    %v1294 = vld [vmem:[#allocation11 + $0xcc] sm:$0xf]
    %v1295 = vld [vmem:[#allocation11 + $0xd0] sm:$0xf]
    %v1296 = vld [vmem:[#allocation11 + $0xd4] sm:$0xf]
    %v1297 = vld [vmem:[#allocation11 + $0xd8] sm:$0xf]
    %v1298 = vld [vmem:[#allocation11 + $0xdc] sm:$0xf]
    %v1299 = vld [vmem:[#allocation11 + $0xe0] sm:$0xf]
    %v1300 = vld [vmem:[#allocation11 + $0xe4] sm:$0xf]
    %v1301 = vld [vmem:[#allocation11 + $0xe8] sm:$0xf]
    %v1302 = vld [vmem:[#allocation11 + $0xec] sm:$0xf]
    %v1303 = vld [vmem:[#allocation11 + $0xf0] sm:$0xf]
    %v1304 = vld [vmem:[#allocation11 + $0xf4] sm:$0xf]
    %v1305 = vld [vmem:[#allocation11 + $0xf8] sm:$0xf]
    %v1306 = vld [vmem:[#allocation11 + $0xfc] sm:$0xf]
    %v1307 = vld [vmem:[#allocation13] sm:$0x1]
    %v1309 = vlaneseq
    %v1310 = vshrl.u32 %v1309, 7
    %v1311 = vsub.s32 0, %v1310
    %v1312 = vrot.slane %v1307, %v1311
    %v1378 = vunpack.c.l.b16 %v1243
    %v1379 = vunpack.c.l.b16 %v1244
    %v1380 = vunpack.c.l.b16 %v1245
    %v1381 = vunpack.c.l.b16 %v1246
    %v1382 = vunpack.c.l.b16 %v1247
    %v1383 = vunpack.c.l.b16 %v1248
    %v1384 = vunpack.c.l.b16 %v1249
    %v1385 = vunpack.c.l.b16 %v1250
    %v1386 = vunpack.c.l.b16 %v1251
    %v1387 = vunpack.c.l.b16 %v1252
    %v1388 = vunpack.c.l.b16 %v1253
    %v1389 = vunpack.c.l.b16 %v1254
    %v1390 = vunpack.c.l.b16 %v1255
    %v1391 = vunpack.c.l.b16 %v1256
    %v1392 = vunpack.c.l.b16 %v1257
    %v1393 = vunpack.c.l.b16 %v1258
    %v1394 = vunpack.c.l.b16 %v1259
    %v1395 = vunpack.c.l.b16 %v1260
    %v1396 = vunpack.c.l.b16 %v1261
    %v1397 = vunpack.c.l.b16 %v1262
    %v1398 = vunpack.c.l.b16 %v1263
    %v1399 = vunpack.c.l.b16 %v1264
    %v1400 = vunpack.c.l.b16 %v1265
    %v1401 = vunpack.c.l.b16 %v1266
    %v1402 = vunpack.c.l.b16 %v1267
    %v1403 = vunpack.c.l.b16 %v1268
    %v1404 = vunpack.c.l.b16 %v1269
    %v1405 = vunpack.c.l.b16 %v1270
    %v1406 = vunpack.c.l.b16 %v1271
    %v1407 = vunpack.c.l.b16 %v1272
    %v1408 = vunpack.c.l.b16 %v1273
    %v1409 = vunpack.c.l.b16 %v1274
    %v1410 = vunpack.c.l.b16 %v1275
    %v1411 = vunpack.c.l.b16 %v1276
    %v1412 = vunpack.c.l.b16 %v1277
    %v1413 = vunpack.c.l.b16 %v1278
    %v1414 = vunpack.c.l.b16 %v1279
    %v1415 = vunpack.c.l.b16 %v1280
    %v1416 = vunpack.c.l.b16 %v1281
    %v1417 = vunpack.c.l.b16 %v1282
    %v1418 = vunpack.c.l.b16 %v1283
    %v1419 = vunpack.c.l.b16 %v1284
    %v1420 = vunpack.c.l.b16 %v1285
    %v1421 = vunpack.c.l.b16 %v1286
    %v1422 = vunpack.c.l.b16 %v1287
    %v1423 = vunpack.c.l.b16 %v1288
    %v1424 = vunpack.c.l.b16 %v1289
    %v1425 = vunpack.c.l.b16 %v1290
    %v1426 = vunpack.c.l.b16 %v1291
    %v1427 = vunpack.c.l.b16 %v1292
    %v1428 = vunpack.c.l.b16 %v1293
    %v1429 = vunpack.c.l.b16 %v1294
    %v1430 = vunpack.c.l.b16 %v1295
    %v1431 = vunpack.c.l.b16 %v1296
    %v1432 = vunpack.c.l.b16 %v1297
    %v1433 = vunpack.c.l.b16 %v1298
    %v1434 = vunpack.c.l.b16 %v1299
    %v1435 = vunpack.c.l.b16 %v1300
    %v1436 = vunpack.c.l.b16 %v1301
    %v1437 = vunpack.c.l.b16 %v1302
    %v1438 = vunpack.c.l.b16 %v1303
    %v1439 = vunpack.c.l.b16 %v1304
    %v1440 = vunpack.c.l.b16 %v1305
    %v1441 = vunpack.c.l.b16 %v1306
    %v1442 = vpack.c.b16 %v1379, %v1378
    %v1443 = vpack.c.b16 %v1381, %v1380
    %v1444 = vpack.c.b16 %v1383, %v1382
    %v1445 = vpack.c.b16 %v1385, %v1384
    %v1446 = vpack.c.b16 %v1387, %v1386
    %v1447 = vpack.c.b16 %v1389, %v1388
    %v1448 = vpack.c.b16 %v1391, %v1390
    %v1449 = vpack.c.b16 %v1393, %v1392
    %v1450 = vpack.c.b16 %v1395, %v1394
    %v1451 = vpack.c.b16 %v1397, %v1396
    %v1452 = vpack.c.b16 %v1399, %v1398
    %v1453 = vpack.c.b16 %v1401, %v1400
    %v1454 = vpack.c.b16 %v1403, %v1402
    %v1455 = vpack.c.b16 %v1405, %v1404
    %v1456 = vpack.c.b16 %v1407, %v1406
    %v1457 = vpack.c.b16 %v1409, %v1408
    %v1458 = vpack.c.b16 %v1411, %v1410
    %v1459 = vpack.c.b16 %v1413, %v1412
    %v1460 = vpack.c.b16 %v1415, %v1414
    %v1461 = vpack.c.b16 %v1417, %v1416
    %v1462 = vpack.c.b16 %v1419, %v1418
    %v1463 = vpack.c.b16 %v1421, %v1420
    %v1464 = vpack.c.b16 %v1423, %v1422
    %v1465 = vpack.c.b16 %v1425, %v1424
    %v1466 = vpack.c.b16 %v1427, %v1426
    %v1467 = vpack.c.b16 %v1429, %v1428
    %v1468 = vpack.c.b16 %v1431, %v1430
    %v1469 = vpack.c.b16 %v1433, %v1432
    %v1470 = vpack.c.b16 %v1435, %v1434
    %v1471 = vpack.c.b16 %v1437, %v1436
    %v1472 = vpack.c.b16 %v1439, %v1438
    %v1473 = vpack.c.b16 %v1441, %v1440
    %1506 = vmatprep.subr.bf16.mxu0 0
    %1507 = vmatpush1.bf16.msra.mxu0 %v1442
    %1508 = vmatprep.subr.bf16.mxu0 0
    %1509 = vmatpush1.bf16.msra.mxu0 %v1443
    %1510 = vmatprep.subr.bf16.mxu0 0
    %1511 = vmatpush1.bf16.msra.mxu0 %v1444
    %1512 = vmatprep.subr.bf16.mxu0 0
    %1513 = vmatpush1.bf16.msra.mxu0 %v1445
    %1514 = vmatprep.subr.bf16.mxu0 0
    %1515 = vmatpush1.bf16.msra.mxu0 %v1446
    %1516 = vmatprep.subr.bf16.mxu0 0
    %1517 = vmatpush1.bf16.msra.mxu0 %v1447
    %1518 = vmatprep.subr.bf16.mxu0 0
    %1519 = vmatpush1.bf16.msra.mxu0 %v1448
    %1520 = vmatprep.subr.bf16.mxu0 0
    %1521 = vmatpush1.bf16.msra.mxu0 %v1449
    %1522 = vmatprep.subr.bf16.mxu0 0
    %1523 = vmatpush1.bf16.msra.mxu0 %v1450
    %1524 = vmatprep.subr.bf16.mxu0 0
    %1525 = vmatpush1.bf16.msra.mxu0 %v1451
    %1526 = vmatprep.subr.bf16.mxu0 0
    %1527 = vmatpush1.bf16.msra.mxu0 %v1452
    %1528 = vmatprep.subr.bf16.mxu0 0
    %1529 = vmatpush1.bf16.msra.mxu0 %v1453
    %1530 = vmatprep.subr.bf16.mxu0 0
    %1531 = vmatpush1.bf16.msra.mxu0 %v1454
    %1532 = vmatprep.subr.bf16.mxu0 0
    %1533 = vmatpush1.bf16.msra.mxu0 %v1455
    %1534 = vmatprep.subr.bf16.mxu0 0
    %1535 = vmatpush1.bf16.msra.mxu0 %v1456
    %1536 = vmatprep.subr.bf16.mxu0 0
    %1537 = vmatpush1.bf16.msra.mxu0 %v1457
    %1538 = vmatprep.mubr.bf16.mxu0 %v1240
    %1539 = vmatmul.mubr.bf16.gmra.mrb[0].mxu0 %v1239
    %v1540 = vpop.f32.mrb[0].mxu0
    %v1541 = vadd.f32 %v1312, %v1540
    %v1542 = vpop.f32.mrb[0].mxu0
    %v1543 = vpop.f32.mrb[0].mxu0
    %v1544 = vpop.f32.mrb[0].mxu0
    %1545 = vdwg.mxu0
    %1546 = vmatprep.subr.bf16.mxu0 0
    %1547 = vmatpush1.bf16.msra.mxu0 %v1458
    %1548 = vmatprep.subr.bf16.mxu0 0
    %1549 = vmatpush1.bf16.msra.mxu0 %v1459
    %1550 = vmatprep.subr.bf16.mxu0 0
    %1551 = vmatpush1.bf16.msra.mxu0 %v1460
    %1552 = vmatprep.subr.bf16.mxu0 0
    %1553 = vmatpush1.bf16.msra.mxu0 %v1461
    %1554 = vmatprep.subr.bf16.mxu0 0
    %1555 = vmatpush1.bf16.msra.mxu0 %v1462
    %1556 = vmatprep.subr.bf16.mxu0 0
    %1557 = vmatpush1.bf16.msra.mxu0 %v1463
    %1558 = vmatprep.subr.bf16.mxu0 0
    %1559 = vmatpush1.bf16.msra.mxu0 %v1464
    %1560 = vmatprep.subr.bf16.mxu0 0
    %1561 = vmatpush1.bf16.msra.mxu0 %v1465
    %1562 = vmatprep.subr.bf16.mxu0 0
    %1563 = vmatpush1.bf16.msra.mxu0 %v1466
    %1564 = vmatprep.subr.bf16.mxu0 0
    %1565 = vmatpush1.bf16.msra.mxu0 %v1467
    %1566 = vmatprep.subr.bf16.mxu0 0
    %1567 = vmatpush1.bf16.msra.mxu0 %v1468
    %1568 = vmatprep.subr.bf16.mxu0 0
    %1569 = vmatpush1.bf16.msra.mxu0 %v1469
    %1570 = vmatprep.subr.bf16.mxu0 0
    %1571 = vmatpush1.bf16.msra.mxu0 %v1470
    %1572 = vmatprep.subr.bf16.mxu0 0
    %1573 = vmatpush1.bf16.msra.mxu0 %v1471
    %1574 = vmatprep.subr.bf16.mxu0 0
    %1575 = vmatpush1.bf16.msra.mxu0 %v1472
    %1576 = vmatprep.subr.bf16.mxu0 0
    %1577 = vmatpush1.bf16.msra.mxu0 %v1473
    %1578 = vmatprep.mubr.bf16.mxu0 %v1242
    %1579 = vmatmul.mubr.bf16.gmra.mrb[0].mxu0 %v1241
    %v1580 = vpop.f32.mrb[0].mxu0
    %v1581 = vadd.f32 %v1541, %v1580
    %v1582 = vpop.f32.mrb[0].mxu0
    %v1583 = vpop.f32.mrb[0].mxu0
    %v1584 = vpop.f32.mrb[0].mxu0
    %1585 = vdwg.mxu0
    %1586 = vst [vmem:[#allocation14] sm:$0xff] %v1581
    // Predicated region
    $region58: #{tpu_custom_call.1} parent=1 // pred_check
      _
    $region59: #{tpu_custom_call.1} parent=1 // pred_check_branch
      %1588 = sbr.rel (0) target = $region61
    $region60: #{tpu_custom_call.1} parent=1 // pred_region
      %s1590 = ssub.s32 128, 128
      %1591 = vsyncadd [#allocation4], %s1590
      %s1593 = sshll.u32 [#allocation14], 4
      %s1594 = int_to_ptr.vmem [resolvable:$true] %s1593
      %1596 = dma.vmem_to_hbm [thread:$0]  %s1594, 128, %s7, [#allocation4]
    $region61: #{tpu_custom_call.1} parent=1 // pred_fallthru
      _
    // Predicated region
    $region62: #{tpu_custom_call.1} parent=1 // pred_check
      _
    $region63: #{tpu_custom_call.1} parent=1 // pred_check_branch
      %1598 = sbr.rel (0) target = $region65
    $region64: #{tpu_custom_call.1} parent=1 // pred_region
      %1599 = dma.done [#allocation4], 128
    $region65: #{tpu_custom_call.1} parent=1 // pred_fallthru
      _
    %1600 = vsyncpa [#allocation3], 1
    %1601 = vsyncpa [#allocation6], 1
    %1602 = vsyncpa [#allocation9], 1
    %1603 = vsyncpa [#allocation12], 1
    %1604 = vsyncpa [#allocation4], 1

</llo_original>
